<compile_context>
chip_gen: v7x
topology: tpu7x:2x2x1
jax: 0.10.0
libtpu: 0.0.40
codegen_flags: <defaults>
</compile_context>

<pallas_src>
import functools

import jax
import jax.numpy as jnp
from jax import lax
from jax.experimental import pallas as pl
from jax.experimental.pallas import tpu as pltpu


# --------------------------- kernels ---------------------------------------

def _wh_sum_kernel(im_ref, s_ref, neg_ref, dcol_ref, drow_ref,
                   out_spart_ref, out_sneg_ref, out_im_ref, *, margin):
    """VSE0 (sum) path: per-tile column sums, diagonal handled analytically."""
    B = s_ref.shape[0]
    N = neg_ref.shape[1]

    im_tile = im_ref[...]                       # (TB, D)   tiled per step
    s_full = s_ref[...]                         # (B, D)    VMEM resident
    neg_tile = neg_ref[...]                     # (TB, N, D) tiled/pipelined

    # part_tile[r, j] = im[row0+r] . s[j]                           (MXU)
    part_tile = lax.dot_general(
        im_tile, s_full, (((1,), (1,)), ((), ())),
        preferred_element_type=jnp.float32)                         # (TB, B) f32
    # neg_sc[r, n] = im[row0+r] . neg[row0+r, n]   'bnd,bd->bn'     (MXU, batched)
    neg_sc = lax.dot_general(
        neg_tile, im_tile, (((2,), (1,)), ((0,), (0,))),
        preferred_element_type=jnp.float32)                         # (TB, N) f32

    # Hoisted hinge offsets (diagonal computed once in the wrapper).
    m = jnp.float32(margin)
    m_minus_dcol = m - dcol_ref[...]                                # (TB, 1)
    m_minus_drow = m - drow_ref[...]                                # (1, B)

    cost_s_part = jnp.maximum(part_tile + m_minus_dcol, 0.0)        # (TB, B)
    cost_s_neg = jnp.maximum(neg_sc + m_minus_dcol, 0.0)            # (TB, N)
    cost_im = jnp.maximum(part_tile + m_minus_drow, 0.0)            # (TB, B)

    # Sublane-only reductions -> lane-dense (1, B)/(1, N) rows in VMEM.
    # The eye mask is skipped: each masked element equals max(margin, 0), and
    # the wrapper subtracts 2*B*max(margin, 0) once.
    out_spart_ref[...] = jnp.sum(cost_s_part, axis=0,
                                 keepdims=True).reshape(1, 1, B)
    out_sneg_ref[...] = jnp.sum(cost_s_neg, axis=0,
                                keepdims=True).reshape(1, 1, N)
    out_im_ref[...] = jnp.sum(cost_im, axis=0,
                              keepdims=True).reshape(1, 1, B)


def _wh_maxviol_kernel(im_ref, s_ref, neg_ref, dcol_ref, drow_ref,
                       out_s_ref, out_im_ref, *, margin):
    """VSE++ (max_violation) path: diagonal mask must precede the maxes."""
    TB = im_ref.shape[0]
    B = s_ref.shape[0]

    im_tile = im_ref[...]                       # (TB, D)
    s_full = s_ref[...]                         # (B, D)
    neg_tile = neg_ref[...]                     # (TB, N, D)

    part_tile = lax.dot_general(
        im_tile, s_full, (((1,), (1,)), ((), ())),
        preferred_element_type=jnp.float32)                         # (TB, B)
    neg_sc = lax.dot_general(
        neg_tile, im_tile, (((2,), (1,)), ((0,), (0,))),
        preferred_element_type=jnp.float32)                         # (TB, N)

    m = jnp.float32(margin)
    m_minus_dcol = m - dcol_ref[...]                                # (TB, 1)
    m_minus_drow = m - drow_ref[...]                                # (1, B)

    cost_s_part = jnp.maximum(part_tile + m_minus_dcol, 0.0)        # (TB, B)
    cost_s_neg = jnp.maximum(neg_sc + m_minus_dcol, 0.0)            # (TB, N)
    cost_im = jnp.maximum(part_tile + m_minus_drow, 0.0)            # (TB, B)

    # Diagonal mask with GLOBAL row indices (correct under row tiling).
    row0 = pl.program_id(0) * TB
    row_ids = lax.broadcasted_iota(jnp.int32, (TB, B), 0) + row0
    col_ids = lax.broadcasted_iota(jnp.int32, (TB, B), 1)
    eye = row_ids == col_ids
    cost_s_part = jnp.where(eye, 0.0, cost_s_part)
    cost_im = jnp.where(eye, 0.0, cost_im)

    # Per-row max over [part | neg] columns; per-column max over rows.
    cs = jnp.maximum(jnp.max(cost_s_part, axis=1, keepdims=True),
                     jnp.max(cost_s_neg, axis=1, keepdims=True))    # (TB, 1)
    out_s_ref[0, 0] = jnp.sum(cs)
    out_im_ref[...] = jnp.max(cost_im, axis=0,
                              keepdims=True).reshape(1, 1, B)


# --------------------------- tiling helpers ---------------------------------

def _vmem_capacity_bytes():
    """Physical VMEM per TensorCore, with robust fallbacks."""
    try:
        info = pltpu.get_tpu_info()
        for attr in ("vmem_capacity_bytes", "vmem_size_bytes", "vmem_bytes"):
            v = getattr(info, attr, None)
            if v:
                return int(v)
    except Exception:
        pass
    try:
        kind = jax.devices()[0].device_kind.lower()
        if "v7" in kind:
            return 64 * 1024 * 1024
    except Exception:
        pass
    return 128 * 1024 * 1024


def _has_multiple_tensorcores():
    """True for megacore / multi-TC chips where grid sharding matters."""
    try:
        kind = jax.devices()[0].device_kind.lower()
        return any(t in kind for t in ("v7", "v5p", "v4", "v3", "v2"))
    except Exception:
        return False


def _sublane_multiple(dtype):
    item = jnp.dtype(dtype).itemsize
    return max(8, 32 // max(item, 1))          # 8 f32, 16 bf16, 32 int8/fp8


def _lane_pad(n):
    return ((n + 127) // 128) * 128


def _per_row_vmem_bytes(B, N, D, im_dtype, neg_dtype):
    """Scoped-VMEM bytes that scale with TB (one image row of the tile)."""
    im_item = jnp.dtype(im_dtype).itemsize
    neg_item = jnp.dtype(neg_dtype).itemsize
    neg = 2 * N * _lane_pad(D) * neg_item          # double-buffered neg tile
    imb = 2 * _lane_pad(D) * im_item               # double-buffered im tile
    dcol = 2 * 128 * 4                             # (TB,1) f32, lane-padded, 2 bufs
    inter = 3 * _lane_pad(B) * 4 + 2 * _lane_pad(N) * 4   # f32 intermediates
    return neg + imb + dcol + inter


def _fixed_vmem_bytes(B, N, D, s_dtype):
    """Scoped-VMEM bytes independent of TB (resident blocks, outputs, slack)."""
    s_item = jnp.dtype(s_dtype).itemsize
    sub_b = ((B + 7) // 8) * 8
    s_res = 2 * sub_b * _lane_pad(D) * s_item      # resident s (counted 2x: no Buffered(1))
    drow = 2 * 8 * _lane_pad(B) * 4                # resident (1, B) diag row
    outs = 2 * 3 * 8 * (_lane_pad(B) + _lane_pad(N)) * 4
    return s_res + drow + outs + (2 << 20)         # + slack for compiler scratch


def _pick_block_rows(B, N, D, im_dtype, neg_dtype, requested, vmem_limit,
                     prefer_multi_tile):
    """Largest legal row tile that fits the scoped-VMEM budget."""
    if requested is not None:
        if B % requested != 0:
            raise ValueError(f"block_rows={requested} must divide batch={B}")
        return int(requested)

    sub = _sublane_multiple(im_dtype)
    per_row = _per_row_vmem_bytes(B, N, D, im_dtype, neg_dtype)
    fixed = _fixed_vmem_bytes(B, N, D, im_dtype)
    max_rows = max((vmem_limit - fixed) // per_row, 1)

    # Legal tiles: divisors of B that are sublane-aligned (or the full batch).
    cands = [tb for tb in range(1, B + 1)
             if B % tb == 0 and (tb % sub == 0 or tb == B)]
    fitting = [tb for tb in cands if tb <= max_rows]
    if not fitting:
        # Even the smallest legal tile overshoots the budget; take it and let
        # the wrapper raise the scoped limit toward physical VMEM.
        fitting = [min(cands)]
    if prefer_multi_tile:
        multi = [tb for tb in fitting if B // tb >= 2]
        if multi:
            return max(multi)       # biggest tile that still gives both TCs work
    return max(fitting)


# --------------------------- wrapper -----------------------------------------

@functools.partial(jax.jit,
                   static_argnames=("margin", "max_violation", "block_rows"))
def wh_contrastive_loss(im, s, neg_feature, margin=0.0, max_violation=False,
                        block_rows=None):
    """im: (B, D), s: (B, D), neg_feature: (B, N_neg, D). Returns scalar loss."""
    B, D = im.shape
    _, N, _ = neg_feature.shape

    # Hoisted score-matrix diagonal: diag[i] = im[i].s[i], computed ONCE here
    # (B*D flops) instead of per grid step inside the kernel.
    diag = jnp.sum(im.astype(jnp.float32) * s.astype(jnp.float32), axis=-1)
    diag_col = diag.reshape(B, 1)
    diag_row = diag.reshape(1, B)

    # Chip-aware scoped-VMEM budget: ~75% of physical VMEM, capped at 100 MiB
    # (=> 96-100 MiB on v5e/v6e's 128 MiB, 48 MiB on v7x's 64 MiB).
    vmem_cap = _vmem_capacity_bytes()
    vmem_limit = min(100 * 1024 * 1024, (vmem_cap * 3) // 4)

    TB = _pick_block_rows(B, N, D, im.dtype, neg_feature.dtype, block_rows,
                          vmem_limit,
                          prefer_multi_tile=_has_multiple_tensorcores())
    G = B // TB

    # Make sure the scoped limit covers the chosen tiling (generous estimate),
    # without exceeding ~90% of physical VMEM.
    needed = (_fixed_vmem_bytes(B, N, D, im.dtype)
              + TB * _per_row_vmem_bytes(B, N, D, im.dtype, neg_feature.dtype))
    vmem_limit = int(min((vmem_cap * 9) // 10, max(vmem_limit, needed)))

    in_specs = [
        pl.BlockSpec((TB, D), lambda g: (g, 0)),         # im:  tiled per step
        pl.BlockSpec((B, D), lambda g: (0, 0)),          # s:   VMEM resident
        pl.BlockSpec((TB, N, D), lambda g: (g, 0, 0)),   # neg: tiled/pipelined
        pl.BlockSpec((TB, 1), lambda g: (g, 0)),         # diag column (tiled)
        pl.BlockSpec((1, B), lambda g: (0, 0)),          # diag row (resident)
    ]
    compiler_params = pltpu.CompilerParams(
        dimension_semantics=("parallel",),      # tiles independent -> megacore
        vmem_limit_bytes=int(vmem_limit),
    )

    if max_violation:
        kernel = functools.partial(_wh_maxviol_kernel, margin=float(margin))
        out_s, out_im = pl.pallas_call(
            kernel,
            out_shape=(jax.ShapeDtypeStruct((G, 1), jnp.float32),      # per-tile Σ row-max
                       jax.ShapeDtypeStruct((G, 1, B), jnp.float32)),  # per-tile col-max
            grid_spec=pltpu.PrefetchScalarGridSpec(
                num_scalar_prefetch=0,
                grid=(G,),
                in_specs=in_specs,
                out_specs=[
                    pl.BlockSpec((1, 1), lambda g: (g, 0),
                                 memory_space=pltpu.MemorySpace.SMEM),
                    pl.BlockSpec((1, 1, B), lambda g: (g, 0, 0)),
                ],
            ),
            compiler_params=compiler_params,
        )(im, s, neg_feature, diag_col, diag_row)
        # Tiny cross-tile combine in plain JAX.
        return jnp.sum(out_s) + jnp.sum(jnp.max(out_im[:, 0, :], axis=0))

    kernel = functools.partial(_wh_sum_kernel, margin=float(margin))
    out_spart, out_sneg, out_im = pl.pallas_call(
        kernel,
        out_shape=(jax.ShapeDtypeStruct((G, 1, B), jnp.float32),   # per-tile col sums
                   jax.ShapeDtypeStruct((G, 1, N), jnp.float32),
                   jax.ShapeDtypeStruct((G, 1, B), jnp.float32)),
        grid_spec=pltpu.PrefetchScalarGridSpec(
            num_scalar_prefetch=0,
            grid=(G,),
            in_specs=in_specs,
            out_specs=[
                pl.BlockSpec((1, 1, B), lambda g: (g, 0, 0)),
                pl.BlockSpec((1, 1, N), lambda g: (g, 0, 0)),
                pl.BlockSpec((1, 1, B), lambda g: (g, 0, 0)),
            ],
        ),
        compiler_params=compiler_params,
    )(im, s, neg_feature, diag_col, diag_row)

    # Analytic diagonal correction: each unmasked diagonal entry of
    # cost_s[:, :B] and cost_im equals max(margin, 0); there are B of each.
    diag_fix = 2.0 * B * max(float(margin), 0.0)
    return jnp.sum(out_spart) + jnp.sum(out_sneg) + jnp.sum(out_im) - diag_fix


# --------------------------- reference & test --------------------------------

def _reference_loss(im, s, neg_feature, margin=0.0, max_violation=False):
    """Pure-JAX mirror of the PyTorch forward, for verification."""
    B = im.shape[0]
    part = im @ s.T
    neg_sc = jnp.sum(im[:, None, :] * neg_feature, axis=-1)
    scores = jnp.concatenate([part, neg_sc], axis=1)
    diag = jnp.diagonal(part).reshape(B, 1)
    cost_s = jnp.maximum(margin + scores - diag, 0.0)
    cost_im = jnp.maximum(margin + part - diag.T, 0.0)
    eye = jnp.eye(B, dtype=bool)
    cost_s = cost_s.at[:, :B].set(jnp.where(eye, 0.0, cost_s[:, :B]))
    cost_im = jnp.where(eye, 0.0, cost_im)
    if max_violation:
        return jnp.sum(jnp.max(cost_s, axis=1)) + jnp.sum(jnp.max(cost_im, axis=0))
    return jnp.sum(cost_s) + jnp.sum(cost_im)


if __name__ == "__main__":
    B, N_NEG, D = 16, 8, 128
    key = jax.random.PRNGKey(0)
    k_im, k_s, k_neg = jax.random.split(key, 3)

    im = jax.random.normal(k_im, (B, D), dtype=jnp.float32)
    s = jax.random.normal(k_s, (B, D), dtype=jnp.float32)
    # neg_s in PyTorch is a list of B tensors, each (N_neg, D); stack -> (B, N_neg, D)
    neg_list = [
        jax.random.normal(jax.random.fold_in(k_neg, i), (N_NEG, D), dtype=jnp.float32)
        for i in range(B)
    ]
    neg_feature = jnp.stack(neg_list, axis=0)

    # VSE0 (sum) path, auto (chip-aware) tiling.
    loss = wh_contrastive_loss(im, s, neg_feature, margin=0.2, max_violation=False)
    jax.block_until_ready(loss)
    ref = _reference_loss(im, s, neg_feature, margin=0.2, max_violation=False)
    assert jnp.allclose(loss, ref, rtol=2e-4, atol=1e-2), (loss, ref)

    # VSE0 with an explicit 2-tile grid (exercises row tiling on every chip).
    loss_t = wh_contrastive_loss(im, s, neg_feature, margin=0.2,
                                 max_violation=False, block_rows=8)
    jax.block_until_ready(loss_t)
    assert jnp.allclose(loss_t, ref, rtol=2e-4, atol=1e-2), (loss_t, ref)

    # VSE++ (max_violation) path, explicit tiling (global-row eye mask path).
    loss_mv = wh_contrastive_loss(im, s, neg_feature, margin=0.2,
                                  max_violation=True, block_rows=8)
    jax.block_until_ready(loss_mv)
    ref_mv = _reference_loss(im, s, neg_feature, margin=0.2, max_violation=True)
    assert jnp.allclose(loss_mv, ref_mv, rtol=2e-4, atol=1e-2), (loss_mv, ref_mv)

    # Zero margin, auto tiling, VSE++.
    loss_mv0 = wh_contrastive_loss(im, s, neg_feature, margin=0.0,
                                   max_violation=True)
    jax.block_until_ready(loss_mv0)
    ref_mv0 = _reference_loss(im, s, neg_feature, margin=0.0, max_violation=True)
    assert jnp.allclose(loss_mv0, ref_mv0, rtol=2e-4, atol=1e-2), (loss_mv0, ref_mv0)

    print("KERNEL_OK")
</pallas_src>

<mosaic_0001>
module attributes {stable_mosaic.version = 11 : i64} {
  func.func @_wh_sum_kernel(%arg0: i32, %arg1: memref<16x128xf32, #tpu.memory_space<vmem>>, %arg2: memref<16x128xf32, #tpu.memory_space<vmem>>, %arg3: memref<16x8x128xf32, #tpu.memory_space<vmem>>, %arg4: memref<16x1xf32, #tpu.memory_space<vmem>>, %arg5: memref<1x16xf32, #tpu.memory_space<vmem>>, %arg6: memref<1x1x16xf32, #tpu.memory_space<vmem>>, %arg7: memref<1x1x8xf32, #tpu.memory_space<vmem>>, %arg8: memref<1x1x16xf32, #tpu.memory_space<vmem>>) attributes {dimension_semantics = [#tpu.dimension_semantics<parallel>], iteration_bounds = array<i64: 1>, scalar_prefetch = 0 : i64, scratch_operands = 0 : i64, tpu.core_type = #tpu.core_type<tc>, window_params = [{transform_indices = @transform_0, window_bounds = array<i64: 16, 128>}, {pipeline_mode = #tpu.pipeline_mode<synchronous>, transform_indices = @transform_1, window_bounds = array<i64: 16, 128>}, {transform_indices = @transform_2, window_bounds = array<i64: 16, 8, 128>}, {transform_indices = @transform_3, window_bounds = array<i64: 16, 1>}, {pipeline_mode = #tpu.pipeline_mode<synchronous>, transform_indices = @transform_4, window_bounds = array<i64: 1, 16>}, {transform_indices = @transform_5, window_bounds = array<i64: 1, 1, 16>}, {transform_indices = @transform_6, window_bounds = array<i64: 1, 1, 8>}, {transform_indices = @transform_7, window_bounds = array<i64: 1, 1, 16>}]} {
    %c0 = arith.constant 0 : index
    %c0_0 = arith.constant 0 : index
    %0 = vector.load %arg1[%c0, %c0_0] : memref<16x128xf32, #tpu.memory_space<vmem>>, vector<16x128xf32>
    %c0_1 = arith.constant 0 : index
    %c0_2 = arith.constant 0 : index
    %1 = vector.load %arg2[%c0_1, %c0_2] : memref<16x128xf32, #tpu.memory_space<vmem>>, vector<16x128xf32>
    %c0_3 = arith.constant 0 : index
    %c0_4 = arith.constant 0 : index
    %c0_5 = arith.constant 0 : index
    %2 = vector.load %arg3[%c0_3, %c0_4, %c0_5] : memref<16x8x128xf32, #tpu.memory_space<vmem>>, vector<16x8x128xf32>
    %cst = arith.constant dense<0.000000e+00> : vector<16x16xf32>
    %3 = tpu.matmul %0, %1, %cst {dimension_numbers = #tpu.dot_dimension_numbers<[1], [1], [0], [0], [0, 0, 1, 0], [], []>} : vector<16x128xf32>, vector<16x128xf32>, vector<16x16xf32> -> vector<16x16xf32>
    %cst_6 = arith.constant dense<0.000000e+00> : vector<16x8xf32>
    %4 = tpu.matmul %2, %0, %cst_6 {dimension_numbers = #tpu.dot_dimension_numbers<[2], [1], [1], [], [0, 0, 0, 1], [0], [0]>} : vector<16x8x128xf32>, vector<16x128xf32>, vector<16x8xf32> -> vector<16x8xf32>
    %c0_7 = arith.constant 0 : index
    %c0_8 = arith.constant 0 : index
    %5 = vector.load %arg4[%c0_7, %c0_8] : memref<16x1xf32, #tpu.memory_space<vmem>>, vector<16x1xf32>
    %cst_9 = arith.constant 2.000000e-01 : f32
    %6 = vector.broadcast %cst_9 : f32 to vector<16x1xf32>
    %7 = arith.subf %6, %5 : vector<16x1xf32>
    %c0_10 = arith.constant 0 : index
    %c0_11 = arith.constant 0 : index
    %8 = vector.load %arg5[%c0_10, %c0_11] : memref<1x16xf32, #tpu.memory_space<vmem>>, vector<1x16xf32>
    %cst_12 = arith.constant 2.000000e-01 : f32
    %9 = vector.broadcast %cst_12 : f32 to vector<1x16xf32>
    %10 = arith.subf %9, %8 : vector<1x16xf32>
    %11 = vector.broadcast %7 : vector<16x1xf32> to vector<16x16xf32>
    %12 = arith.addf %3, %11 : vector<16x16xf32>
    %cst_13 = arith.constant 0.000000e+00 : f32
    %13 = vector.broadcast %cst_13 : f32 to vector<16x16xf32>
    %14 = arith.maximumf %12, %13 : vector<16x16xf32>
    %15 = vector.broadcast %7 : vector<16x1xf32> to vector<16x8xf32>
    %16 = arith.addf %4, %15 : vector<16x8xf32>
    %cst_14 = arith.constant 0.000000e+00 : f32
    %17 = vector.broadcast %cst_14 : f32 to vector<16x8xf32>
    %18 = arith.maximumf %16, %17 : vector<16x8xf32>
    %19 = vector.broadcast %10 : vector<1x16xf32> to vector<16x16xf32>
    %20 = arith.addf %3, %19 : vector<16x16xf32>
    %cst_15 = arith.constant 0.000000e+00 : f32
    %21 = vector.broadcast %cst_15 : f32 to vector<16x16xf32>
    %22 = arith.maximumf %20, %21 : vector<16x16xf32>
    %cst_16 = arith.constant dense<0.000000e+00> : vector<16xf32>
    %23 = vector.multi_reduction <add>, %14, %cst_16 [0] : vector<16x16xf32> to vector<16xf32>
    %24 = vector.shape_cast %23 : vector<16xf32> to vector<1x16xf32>
    %25 = vector.shape_cast %24 : vector<1x16xf32> to vector<1x1x16xf32>
    %c0_17 = arith.constant 0 : index
    %c0_18 = arith.constant 0 : index
    %c0_19 = arith.constant 0 : index
    %26 = vector.load %arg6[%c0_17, %c0_18, %c0_19] : memref<1x1x16xf32, #tpu.memory_space<vmem>>, vector<1x1x16xf32>
    tpu.vector_store %arg6[%c0_17, %c0_18, %c0_19], %25 {strides = array<i32>} : memref<1x1x16xf32, #tpu.memory_space<vmem>>, vector<1x1x16xf32>,
    %cst_20 = arith.constant dense<0.000000e+00> : vector<8xf32>
    %27 = vector.multi_reduction <add>, %18, %cst_20 [0] : vector<16x8xf32> to vector<8xf32>
    %28 = vector.shape_cast %27 : vector<8xf32> to vector<1x8xf32>
    %29 = vector.shape_cast %28 : vector<1x8xf32> to vector<1x1x8xf32>
    %c0_21 = arith.constant 0 : index
    %c0_22 = arith.constant 0 : index
    %c0_23 = arith.constant 0 : index
    %30 = vector.load %arg7[%c0_21, %c0_22, %c0_23] : memref<1x1x8xf32, #tpu.memory_space<vmem>>, vector<1x1x8xf32>
    tpu.vector_store %arg7[%c0_21, %c0_22, %c0_23], %29 {strides = array<i32>} : memref<1x1x8xf32, #tpu.memory_space<vmem>>, vector<1x1x8xf32>,
    %cst_24 = arith.constant dense<0.000000e+00> : vector<16xf32>
    %31 = vector.multi_reduction <add>, %22, %cst_24 [0] : vector<16x16xf32> to vector<16xf32>
    %32 = vector.shape_cast %31 : vector<16xf32> to vector<1x16xf32>
    %33 = vector.shape_cast %32 : vector<1x16xf32> to vector<1x1x16xf32>
    %c0_25 = arith.constant 0 : index
    %c0_26 = arith.constant 0 : index
    %c0_27 = arith.constant 0 : index
    %34 = vector.load %arg8[%c0_25, %c0_26, %c0_27] : memref<1x1x16xf32, #tpu.memory_space<vmem>>, vector<1x1x16xf32>
    tpu.vector_store %arg8[%c0_25, %c0_26, %c0_27], %33 {strides = array<i32>} : memref<1x1x16xf32, #tpu.memory_space<vmem>>, vector<1x1x16xf32>,
    return
  }
  func.func @transform_0(%arg0: i32) -> (i32, i32) {
    %c0_i32 = arith.constant 0 : i32
    %c0_i32_0 = arith.constant 0 : i32
    return %arg0, %c0_i32 : i32, i32
  }
  func.func @transform_1(%arg0: i32) -> (i32, i32) {
    %c0_i32 = arith.constant 0 : i32
    %c0_i32_0 = arith.constant 0 : i32
    %c0_i32_1 = arith.constant 0 : i32
    return %c0_i32, %c0_i32_0 : i32, i32
  }
  func.func @transform_2(%arg0: i32) -> (i32, i32, i32) {
    %c0_i32 = arith.constant 0 : i32
    %c0_i32_0 = arith.constant 0 : i32
    %c0_i32_1 = arith.constant 0 : i32
    return %arg0, %c0_i32, %c0_i32_0 : i32, i32, i32
  }
  func.func @transform_3(%arg0: i32) -> (i32, i32) {
    %c0_i32 = arith.constant 0 : i32
    %c0_i32_0 = arith.constant 0 : i32
    return %arg0, %c0_i32 : i32, i32
  }
  func.func @transform_4(%arg0: i32) -> (i32, i32) {
    %c0_i32 = arith.constant 0 : i32
    %c0_i32_0 = arith.constant 0 : i32
    %c0_i32_1 = arith.constant 0 : i32
    return %c0_i32, %c0_i32_0 : i32, i32
  }
  func.func @transform_5(%arg0: i32) -> (i32, i32, i32) {
    %c0_i32 = arith.constant 0 : i32
    %c0_i32_0 = arith.constant 0 : i32
    %c0_i32_1 = arith.constant 0 : i32
    return %arg0, %c0_i32, %c0_i32_0 : i32, i32, i32
  }
  func.func @transform_6(%arg0: i32) -> (i32, i32, i32) {
    %c0_i32 = arith.constant 0 : i32
    %c0_i32_0 = arith.constant 0 : i32
    %c0_i32_1 = arith.constant 0 : i32
    return %arg0, %c0_i32, %c0_i32_0 : i32, i32, i32
  }
  func.func @transform_7(%arg0: i32) -> (i32, i32, i32) {
    %c0_i32 = arith.constant 0 : i32
    %c0_i32_0 = arith.constant 0 : i32
    %c0_i32_1 = arith.constant 0 : i32
    return %arg0, %c0_i32, %c0_i32_0 : i32, i32, i32
  }
}

</mosaic_0001>

<llo_original>
// kernel: wh_contrastive_loss.1
$region0: #{wh_contrastive_loss.1}
  #allocation0 [shape = 'u32[]', space=smem, size = 0x4, offset = 0x4, fixed_abs, tag = 'smem constant byte address 0x4 - core index']
  #allocation1 [shape = 'u32[144,128]{1,0:T(1,128)}', space=vmem, size = 0x12000, scoped, tag = 'internal scratch']
  %s0 = inlined_call_operand.hbm [shape: f32[16,128], index: 0, kind: input, shape index: {}]
  %s1 = inlined_call_operand.hbm [shape: f32[16,128], index: 1, kind: input, shape index: {}]
  %s2 = inlined_call_operand.hbm [shape: f32[16,8,128], index: 2, kind: input, shape index: {}]
  %s3 = inlined_call_operand.hbm [shape: f32[16,1], index: 3, kind: input, shape index: {}]
  %s4 = inlined_call_operand.hbm [shape: f32[1,16], index: 4, kind: input, shape index: {}]
  %s5 = inlined_call_operand.hbm [shape: f32[1,1,16], index: 5, kind: output, shape index: {0}]
  %s6 = inlined_call_operand.hbm [shape: f32[1,1,8], index: 6, kind: output, shape index: {1}]
  %s7 = inlined_call_operand.hbm [shape: f32[1,1,16], index: 7, kind: output, shape index: {2}]
  %8 = xla_tuple %s5, %s6, %s7
  %s9 = sld [smem:[#allocation0]]
  $region66: #{wh_contrastive_loss.1} parent=0
    _
  %s11 = ssub.s32 1, %s9
  %s12 = scalar_select 0, %s11, %s9
  $region1: #{wh_contrastive_loss.1} parent=0
    #allocation2 [shape = 'u8[8192]{0}', space=vmem, size = 0x2000, scoped, tag = 'input window, operand 0, single buffered']
    #allocation3 [shape = 's32[1]{0}', space=sflag, size = 0x4, scoped, tag = 'scoped memory for wh_contrastive_loss.1']
    #allocation4 [shape = 's32[1]{0}', space=sflag, size = 0x4, scoped, tag = 'scoped memory for wh_contrastive_loss.1']
    #allocation5 [shape = 'u8[8192]{0}', space=vmem, size = 0x2000, scoped, tag = 'input window, operand 1, single buffered']
    #allocation6 [shape = 's32[1]{0}', space=sflag, size = 0x4, scoped, tag = 'scoped memory for wh_contrastive_loss.1']
    #allocation7 [shape = 'u8[65536]{0}', space=vmem, size = 0x10000, scoped, tag = 'input window, operand 2, single buffered']
    #allocation8 [shape = 'u8[8192]{0}', space=vmem, size = 0x2000, scoped, tag = 'input window, operand 3, single buffered']
    #allocation9 [shape = 's32[1]{0}', space=sflag, size = 0x4, scoped, tag = 'scoped memory for wh_contrastive_loss.1']
    #allocation10 [shape = 'u8[512]{0}', space=vmem, size = 0x400, scoped, tag = 'input window, operand 4, single buffered']
    #allocation11 [shape = 'u8[512]{0}', space=vmem, size = 0x400, scoped, tag = 'output window, operand 0, single buffered']
    #allocation12 [shape = 'u8[512]{0}', space=vmem, size = 0x400, scoped, tag = 'output window, operand 1, single buffered']
    #allocation13 [shape = 's32[1]{0}', space=sflag, size = 0x4, scoped, tag = 'scoped memory for wh_contrastive_loss.1']
    #allocation14 [shape = 'u8[512]{0}', space=vmem, size = 0x400, scoped, tag = 'output window, operand 2, single buffered']
    %13 = vsyncpa [#allocation3], 0
    %14 = vsyncpa [#allocation6], 0
    %15 = vsyncpa [#allocation9], 0
    %16 = vsyncpa [#allocation4], 0
    %17 = vsyncpa [#allocation13], 0
    // Predicated region
    $region2: #{wh_contrastive_loss.1} parent=1 // pred_check
      _
    $region3: #{wh_contrastive_loss.1} parent=1 // pred_check_branch
      %19 = sbr.rel (0) target = $region5
    $region4: #{wh_contrastive_loss.1} parent=1 // pred_region
      %s21 = ssub.s32 256, 256
      %22 = vsyncadd [#allocation3], %s21
      %s23 = sshll.u32 [#allocation2], 4
      %s24 = int_to_ptr.vmem [resolvable:$true] %s23
      %29 = dma.hbm_to_vmem [thread:$0]  %s0, 256, %s24, [#allocation3], 128, 128, 8
    $region5: #{wh_contrastive_loss.1} parent=1 // pred_fallthru
      _
    // Predicated region
    $region6: #{wh_contrastive_loss.1} parent=1 // pred_check
      _
    $region7: #{wh_contrastive_loss.1} parent=1 // pred_check_branch
      %31 = sbr.rel (0) target = $region9
    $region8: #{wh_contrastive_loss.1} parent=1 // pred_region
      %s33 = ssub.s32 256, 256
      %34 = vsyncadd [#allocation6], %s33
      %s35 = sshll.u32 [#allocation5], 4
      %s36 = int_to_ptr.vmem [resolvable:$true] %s35
      %41 = dma.hbm_to_vmem [thread:$0]  %s1, 256, %s36, [#allocation6], 128, 128, 8
    $region9: #{wh_contrastive_loss.1} parent=1 // pred_fallthru
      _
    // Predicated region
    $region10: #{wh_contrastive_loss.1} parent=1 // pred_check
      _
    $region11: #{wh_contrastive_loss.1} parent=1 // pred_check_branch
      %43 = sbr.rel (0) target = $region13
    $region12: #{wh_contrastive_loss.1} parent=1 // pred_region
      %s45 = ssub.s32 2048, 2048
      %46 = vsyncadd [#allocation6], %s45
      %s47 = sshll.u32 [#allocation7], 4
      %s48 = int_to_ptr.vmem [resolvable:$true] %s47
      %53 = dma.hbm_to_vmem [thread:$0]  %s2, 2048, %s48, [#allocation6], 128, 128, 8
    $region13: #{wh_contrastive_loss.1} parent=1 // pred_fallthru
      _
    // Predicated region
    $region14: #{wh_contrastive_loss.1} parent=1 // pred_check
      _
    $region15: #{wh_contrastive_loss.1} parent=1 // pred_check_branch
      %55 = sbr.rel (0) target = $region17
    $region16: #{wh_contrastive_loss.1} parent=1 // pred_region
      %s57 = ssub.s32 256, 256
      %58 = vsyncadd [#allocation9], %s57
      %s59 = sshll.u32 [#allocation8], 4
      %s60 = int_to_ptr.vmem [resolvable:$true] %s59
      %65 = dma.hbm_to_vmem [thread:$0]  %s3, 256, %s60, [#allocation9], 128, 128, 8
    $region17: #{wh_contrastive_loss.1} parent=1 // pred_fallthru
      _
    // Predicated region
    $region18: #{wh_contrastive_loss.1} parent=1 // pred_check
      _
    $region19: #{wh_contrastive_loss.1} parent=1 // pred_check_branch
      %67 = sbr.rel (0) target = $region21
    $region20: #{wh_contrastive_loss.1} parent=1 // pred_region
      %s69 = ssub.s32 16, 16
      %70 = vsyncadd [#allocation9], %s69
      %s72 = sshll.u32 [#allocation10], 4
      %s73 = int_to_ptr.vmem [resolvable:$true] %s72
      %75 = dma.hbm_to_vmem [thread:$0]  %s4, 16, %s73, [#allocation9]
    $region21: #{wh_contrastive_loss.1} parent=1 // pred_fallthru
      _
    // Predicated region
    $region22: #{wh_contrastive_loss.1} parent=1 // pred_check
      _
    $region23: #{wh_contrastive_loss.1} parent=1 // pred_check_branch
      %77 = sbr.rel (0) target = $region25
    $region24: #{wh_contrastive_loss.1} parent=1 // pred_region
      %78 = dma.done [#allocation3], 256
    $region25: #{wh_contrastive_loss.1} parent=1 // pred_fallthru
      _
    // Predicated region
    $region26: #{wh_contrastive_loss.1} parent=1 // pred_check
      _
    $region27: #{wh_contrastive_loss.1} parent=1 // pred_check_branch
      %80 = sbr.rel (0) target = $region29
    $region28: #{wh_contrastive_loss.1} parent=1 // pred_region
      %81 = dma.done [#allocation6], 256
    $region29: #{wh_contrastive_loss.1} parent=1 // pred_fallthru
      _
    // Predicated region
    $region30: #{wh_contrastive_loss.1} parent=1 // pred_check
      _
    $region31: #{wh_contrastive_loss.1} parent=1 // pred_check_branch
      %83 = sbr.rel (0) target = $region33
    $region32: #{wh_contrastive_loss.1} parent=1 // pred_region
      %84 = dma.done [#allocation6], 2048
    $region33: #{wh_contrastive_loss.1} parent=1 // pred_fallthru
      _
    // Predicated region
    $region34: #{wh_contrastive_loss.1} parent=1 // pred_check
      _
    $region35: #{wh_contrastive_loss.1} parent=1 // pred_check_branch
      %86 = sbr.rel (0) target = $region37
    $region36: #{wh_contrastive_loss.1} parent=1 // pred_region
      %87 = dma.done [#allocation9], 256
    $region37: #{wh_contrastive_loss.1} parent=1 // pred_fallthru
      _
    // Predicated region
    $region38: #{wh_contrastive_loss.1} parent=1 // pred_check
      _
    $region39: #{wh_contrastive_loss.1} parent=1 // pred_check_branch
      %89 = sbr.rel (0) target = $region41
    $region40: #{wh_contrastive_loss.1} parent=1 // pred_region
      %90 = dma.done [#allocation9], 16
    $region41: #{wh_contrastive_loss.1} parent=1 // pred_fallthru
      _
    %v91 = vld [vmem:[#allocation2] sm:$0xff]
    %v92 = vld [vmem:[#allocation2 + $0x8] sm:$0xff]
    %v93 = vld [vmem:[#allocation5] sm:$0xff]
    %v94 = vld [vmem:[#allocation5 + $0x8] sm:$0xff]
    %v95 = vld [vmem:[#allocation7] sm:$0xff]
    %v96 = vld [vmem:[#allocation7 + $0x8] sm:$0xff]
    %v97 = vld [vmem:[#allocation7 + $0x10] sm:$0xff]
    %v98 = vld [vmem:[#allocation7 + $0x18] sm:$0xff]
    %v99 = vld [vmem:[#allocation7 + $0x20] sm:$0xff]
    %v100 = vld [vmem:[#allocation7 + $0x28] sm:$0xff]
    %v101 = vld [vmem:[#allocation7 + $0x30] sm:$0xff]
    %v102 = vld [vmem:[#allocation7 + $0x38] sm:$0xff]
    %v103 = vld [vmem:[#allocation7 + $0x40] sm:$0xff]
    %v104 = vld [vmem:[#allocation7 + $0x48] sm:$0xff]
    %v105 = vld [vmem:[#allocation7 + $0x50] sm:$0xff]
    %v106 = vld [vmem:[#allocation7 + $0x58] sm:$0xff]
    %v107 = vld [vmem:[#allocation7 + $0x60] sm:$0xff]
    %v108 = vld [vmem:[#allocation7 + $0x68] sm:$0xff]
    %v109 = vld [vmem:[#allocation7 + $0x70] sm:$0xff]
    %v110 = vld [vmem:[#allocation7 + $0x78] sm:$0xff]
    %111 = vmatprep.subr.mxu0 0.0
    %112 = vmatpush1.xpose.msra.mxu0 %v93
    %113 = vmatprep.subr.mxu0 0.0
    %114 = vmatpush1.xpose.msra.mxu0 %v94
    %115 = vmatprep.subr.mxu0 0.0
    %116 = vmatpush1.xpose.msra.mxu0 0.0
    %117 = vmatprep.subr.mxu0 0.0
    %118 = vmatpush1.xpose.msra.mxu0 0.0
    %119 = vmatprep.subr.mxu0 0.0
    %120 = vmatpush1.xpose.msra.mxu0 0.0
    %121 = vmatprep.subr.mxu0 0.0
    %122 = vmatpush1.xpose.msra.mxu0 0.0
    %123 = vmatprep.subr.mxu0 0.0
    %124 = vmatpush1.xpose.msra.mxu0 0.0
    %125 = vmatprep.subr.mxu0 0.0
    %126 = vmatpush1.xpose.msra.mxu0 0.0
    %127 = vmatprep.subr.mxu0 0.0
    %128 = vmatpush1.xpose.msra.mxu0 0.0
    %129 = vmatprep.subr.mxu0 0.0
    %130 = vmatpush1.xpose.msra.mxu0 0.0
    %131 = vmatprep.subr.mxu0 0.0
    %132 = vmatpush1.xpose.msra.mxu0 0.0
    %133 = vmatprep.subr.mxu0 0.0
    %134 = vmatpush1.xpose.msra.mxu0 0.0
    %135 = vmatprep.subr.mxu0 0.0
    %136 = vmatpush1.xpose.msra.mxu0 0.0
    %137 = vmatprep.subr.mxu0 0.0
    %138 = vmatpush1.xpose.msra.mxu0 0.0
    %139 = vmatprep.subr.mxu0 0.0
    %140 = vmatpush1.xpose.msra.mxu0 0.0
    %141 = vmatprep.subr.mxu0 0.0
    %142 = vmatpush1.xpose.msra.mxu0 0.0
    %143 = vmatprep.subr.mxu0 0.0
    %144 = vmatpush1.xpose.msra.mxu0 0.0
    %145 = vmatprep.subr.mxu0 0.0
    %146 = vmatpush1.xpose.msra.mxu0 0.0
    %147 = vmatprep.subr.mxu0 0.0
    %148 = vmatpush1.xpose.msra.mxu0 0.0
    %149 = vmatprep.subr.mxu0 0.0
    %150 = vmatpush1.xpose.msra.mxu0 0.0
    %151 = vmatprep.subr.mxu0 0.0
    %152 = vmatpush1.xpose.msra.mxu0 0.0
    %153 = vmatprep.subr.mxu0 0.0
    %154 = vmatpush1.xpose.msra.mxu0 0.0
    %155 = vmatprep.subr.mxu0 0.0
    %156 = vmatpush1.xpose.msra.mxu0 0.0
    %157 = vmatprep.subr.mxu0 0.0
    %158 = vmatpush1.xpose.msra.mxu0 0.0
    %159 = vmatprep.subr.mxu0 0.0
    %160 = vmatpush1.xpose.msra.mxu0 0.0
    %161 = vmatprep.subr.mxu0 0.0
    %162 = vmatpush1.xpose.msra.mxu0 0.0
    %163 = vmatprep.subr.mxu0 0.0
    %164 = vmatpush1.xpose.msra.mxu0 0.0
    %165 = vmatprep.subr.mxu0 0.0
    %166 = vmatpush1.xpose.msra.mxu0 0.0
    %167 = vmatprep.subr.mxu0 0.0
    %168 = vmatpush1.xpose.msra.mxu0 0.0
    %169 = vmatprep.subr.mxu0 0.0
    %170 = vmatpush1.xpose.msra.mxu0 0.0
    %171 = vmatprep.subr.mxu0 0.0
    %172 = vmatpush1.xpose.msra.mxu0 0.0
    %173 = vmatprep.subr.mxu0 0.0
    %174 = vmatpush1.xpose.msra.mxu0 0.0
    %175 = vmatprep.mubr.f32.mxu0 0.0
    %176 = vmatmul.mubr.f32.gmra.mrb[0].mxu0 %v91
    %v177 = vpop.f32.mrb[0].mxu0
    %v178 = vadd.f32 0.0, %v177
    %v179 = vpop.f32.mrb[0].mxu0
    %180 = vmatprep.mubr.f32.mxu0 0.0
    %181 = vmatmul.mubr.f32.gmra.mrb[0].mxu0 %v92
    %v182 = vpop.f32.mrb[0].mxu0
    %v183 = vadd.f32 0.0, %v182
    %v184 = vpop.f32.mrb[0].mxu0
    %185 = vdwg.mxu0
    %v186 = vld [vmem:[#allocation8] sm:$0xff]
    %v187 = vld [vmem:[#allocation8 + $0x8] sm:$0xff]
    %v188 = vsub.f32 0.2, %v186
    %v189 = vsub.f32 0.2, %v187
    %v190 = vld [vmem:[#allocation10] sm:$0x1]
    %v191 = vsub.f32 0.2, %v190
    %193 = vset.pattern.permute.xlu0 0
    %194 = vperm.xlu0 %193, %v188
    %v195 = vpop.permute.xlu0 %194
    %198 = vset.pattern.permute.xlu0 0
    %199 = vperm.xlu0 %198, %v189
    %v200 = vpop.permute.xlu0 %199
    %v202 = vadd.f32 %v178, %v195
    %v203 = vadd.f32 %v183, %v200
    %v204 = vmax.f32 %v202, 0.0
    %v205 = vmax.f32 %v203, 0.0
    %v206 = vlaneseq
    %v207 = vshrl.u32 %v206, 7
    %v208 = vsub.s32 0, %v207
    %v209 = vrot.slane %v91, %v208
    %v210 = vmul.f32 %v95, %v209
    %v211 = vlaneseq
    %v212 = vshrl.u32 %v211, 7
    %v213 = vsub.s32 0, %v212
    %v214 = vrot.slane %v195, %v213
    %216 = vadd.xlane.f32.xlu0 %v210
    %v217 = vpop.xlane.xlu0 %216
    %v218 = vadd.f32 %v217, %v214
    %v219 = vlaneseq
    %v220 = vshrl.u32 %v219, 7
    %v221 = vsub.s32 1, %v220
    %v222 = vrot.slane %v91, %v221
    %v223 = vmul.f32 %v96, %v222
    %v224 = vlaneseq
    %v225 = vshrl.u32 %v224, 7
    %v226 = vsub.s32 1, %v225
    %v227 = vrot.slane %v195, %v226
    %229 = vadd.xlane.f32.xlu0 %v223
    %v230 = vpop.xlane.xlu0 %229
    %v231 = vadd.f32 %v230, %v227
    %v232 = vlaneseq
    %v233 = vshrl.u32 %v232, 7
    %v234 = vsub.s32 2, %v233
    %v235 = vrot.slane %v91, %v234
    %v236 = vmul.f32 %v97, %v235
    %v237 = vlaneseq
    %v238 = vshrl.u32 %v237, 7
    %v239 = vsub.s32 2, %v238
    %v240 = vrot.slane %v195, %v239
    %242 = vadd.xlane.f32.xlu0 %v236
    %v243 = vpop.xlane.xlu0 %242
    %v244 = vadd.f32 %v243, %v240
    %v245 = vlaneseq
    %v246 = vshrl.u32 %v245, 7
    %v247 = vsub.s32 3, %v246
    %v248 = vrot.slane %v91, %v247
    %v249 = vmul.f32 %v98, %v248
    %v250 = vlaneseq
    %v251 = vshrl.u32 %v250, 7
    %v252 = vsub.s32 3, %v251
    %v253 = vrot.slane %v195, %v252
    %255 = vadd.xlane.f32.xlu0 %v249
    %v256 = vpop.xlane.xlu0 %255
    %v257 = vadd.f32 %v256, %v253
    %v258 = vlaneseq
    %v259 = vshrl.u32 %v258, 7
    %v260 = vsub.s32 4, %v259
    %v261 = vrot.slane %v91, %v260
    %v262 = vmul.f32 %v99, %v261
    %v263 = vlaneseq
    %v264 = vshrl.u32 %v263, 7
    %v265 = vsub.s32 4, %v264
    %v266 = vrot.slane %v195, %v265
    %268 = vadd.xlane.f32.xlu0 %v262
    %v269 = vpop.xlane.xlu0 %268
    %v270 = vadd.f32 %v269, %v266
    %v271 = vlaneseq
    %v272 = vshrl.u32 %v271, 7
    %v273 = vsub.s32 5, %v272
    %v274 = vrot.slane %v91, %v273
    %v275 = vmul.f32 %v100, %v274
    %v276 = vlaneseq
    %v277 = vshrl.u32 %v276, 7
    %v278 = vsub.s32 5, %v277
    %v279 = vrot.slane %v195, %v278
    %281 = vadd.xlane.f32.xlu0 %v275
    %v282 = vpop.xlane.xlu0 %281
    %v283 = vadd.f32 %v282, %v279
    %v284 = vlaneseq
    %v285 = vshrl.u32 %v284, 7
    %v286 = vsub.s32 6, %v285
    %v287 = vrot.slane %v91, %v286
    %v288 = vmul.f32 %v101, %v287
    %v289 = vlaneseq
    %v290 = vshrl.u32 %v289, 7
    %v291 = vsub.s32 6, %v290
    %v292 = vrot.slane %v195, %v291
    %294 = vadd.xlane.f32.xlu0 %v288
    %v295 = vpop.xlane.xlu0 %294
    %v296 = vadd.f32 %v295, %v292
    %v297 = vlaneseq
    %v298 = vshrl.u32 %v297, 7
    %v299 = vsub.s32 7, %v298
    %v300 = vrot.slane %v91, %v299
    %v301 = vmul.f32 %v102, %v300
    %v302 = vlaneseq
    %v303 = vshrl.u32 %v302, 7
    %v304 = vsub.s32 7, %v303
    %v305 = vrot.slane %v195, %v304
    %307 = vadd.xlane.f32.xlu0 %v301
    %v308 = vpop.xlane.xlu0 %307
    %v309 = vadd.f32 %v308, %v305
    %v310 = vlaneseq
    %v311 = vshrl.u32 %v310, 7
    %v312 = vsub.s32 0, %v311
    %v313 = vrot.slane %v92, %v312
    %v314 = vmul.f32 %v103, %v313
    %v315 = vlaneseq
    %v316 = vshrl.u32 %v315, 7
    %v317 = vsub.s32 0, %v316
    %v318 = vrot.slane %v200, %v317
    %320 = vadd.xlane.f32.xlu0 %v314
    %v321 = vpop.xlane.xlu0 %320
    %v322 = vadd.f32 %v321, %v318
    %v323 = vlaneseq
    %v324 = vshrl.u32 %v323, 7
    %v325 = vsub.s32 1, %v324
    %v326 = vrot.slane %v92, %v325
    %v327 = vmul.f32 %v104, %v326
    %v328 = vlaneseq
    %v329 = vshrl.u32 %v328, 7
    %v330 = vsub.s32 1, %v329
    %v331 = vrot.slane %v200, %v330
    %333 = vadd.xlane.f32.xlu0 %v327
    %v334 = vpop.xlane.xlu0 %333
    %v335 = vadd.f32 %v334, %v331
    %v336 = vlaneseq
    %v337 = vshrl.u32 %v336, 7
    %v338 = vsub.s32 2, %v337
    %v339 = vrot.slane %v92, %v338
    %v340 = vmul.f32 %v105, %v339
    %v341 = vlaneseq
    %v342 = vshrl.u32 %v341, 7
    %v343 = vsub.s32 2, %v342
    %v344 = vrot.slane %v200, %v343
    %346 = vadd.xlane.f32.xlu0 %v340
    %v347 = vpop.xlane.xlu0 %346
    %v348 = vadd.f32 %v347, %v344
    %v349 = vlaneseq
    %v350 = vshrl.u32 %v349, 7
    %v351 = vsub.s32 3, %v350
    %v352 = vrot.slane %v92, %v351
    %v353 = vmul.f32 %v106, %v352
    %v354 = vlaneseq
    %v355 = vshrl.u32 %v354, 7
    %v356 = vsub.s32 3, %v355
    %v357 = vrot.slane %v200, %v356
    %359 = vadd.xlane.f32.xlu0 %v353
    %v360 = vpop.xlane.xlu0 %359
    %v361 = vadd.f32 %v360, %v357
    %v362 = vlaneseq
    %v363 = vshrl.u32 %v362, 7
    %v364 = vsub.s32 4, %v363
    %v365 = vrot.slane %v92, %v364
    %v366 = vmul.f32 %v107, %v365
    %v367 = vlaneseq
    %v368 = vshrl.u32 %v367, 7
    %v369 = vsub.s32 4, %v368
    %v370 = vrot.slane %v200, %v369
    %372 = vadd.xlane.f32.xlu0 %v366
    %v373 = vpop.xlane.xlu0 %372
    %v374 = vadd.f32 %v373, %v370
    %v375 = vlaneseq
    %v376 = vshrl.u32 %v375, 7
    %v377 = vsub.s32 5, %v376
    %v378 = vrot.slane %v92, %v377
    %v379 = vmul.f32 %v108, %v378
    %v380 = vlaneseq
    %v381 = vshrl.u32 %v380, 7
    %v382 = vsub.s32 5, %v381
    %v383 = vrot.slane %v200, %v382
    %385 = vadd.xlane.f32.xlu0 %v379
    %v386 = vpop.xlane.xlu0 %385
    %v387 = vadd.f32 %v386, %v383
    %v388 = vlaneseq
    %v389 = vshrl.u32 %v388, 7
    %v390 = vsub.s32 6, %v389
    %v391 = vrot.slane %v92, %v390
    %v392 = vmul.f32 %v109, %v391
    %v393 = vlaneseq
    %v394 = vshrl.u32 %v393, 7
    %v395 = vsub.s32 6, %v394
    %v396 = vrot.slane %v200, %v395
    %398 = vadd.xlane.f32.xlu0 %v392
    %v399 = vpop.xlane.xlu0 %398
    %v400 = vadd.f32 %v399, %v396
    %v401 = vlaneseq
    %v402 = vshrl.u32 %v401, 7
    %v403 = vsub.s32 7, %v402
    %v404 = vrot.slane %v92, %v403
    %v405 = vmul.f32 %v110, %v404
    %v406 = vlaneseq
    %v407 = vshrl.u32 %v406, 7
    %v408 = vsub.s32 7, %v407
    %v409 = vrot.slane %v200, %v408
    %411 = vadd.xlane.f32.xlu0 %v405
    %v412 = vpop.xlane.xlu0 %411
    %v413 = vadd.f32 %v412, %v409
    %v415 = vlaneseq
    %v416 = vand.u32 %v415, 127
    %v417 = vlaneseq
    %v418 = vshrl.u32 %v417, 7
    %v419 = vsub.s32 %v416, %v418
    %v420 = vrot.slane %v218, %v419
    %v423 = vlaneseq
    %v424 = vshrl.u32 %v423, 7
    %v425 = vsub.s32 %v416, %v424
    %v426 = vrot.slane %v231, %v425
    %v429 = vlaneseq
    %v430 = vshrl.u32 %v429, 7
    %v431 = vsub.s32 %v416, %v430
    %v432 = vrot.slane %v244, %v431
    %v435 = vlaneseq
    %v436 = vshrl.u32 %v435, 7
    %v437 = vsub.s32 %v416, %v436
    %v438 = vrot.slane %v257, %v437
    %v441 = vlaneseq
    %v442 = vshrl.u32 %v441, 7
    %v443 = vsub.s32 %v416, %v442
    %v444 = vrot.slane %v270, %v443
    %v447 = vlaneseq
    %v448 = vshrl.u32 %v447, 7
    %v449 = vsub.s32 %v416, %v448
    %v450 = vrot.slane %v283, %v449
    %v453 = vlaneseq
    %v454 = vshrl.u32 %v453, 7
    %v455 = vsub.s32 %v416, %v454
    %v456 = vrot.slane %v296, %v455
    %v459 = vlaneseq
    %v460 = vshrl.u32 %v459, 7
    %v461 = vsub.s32 %v416, %v460
    %v462 = vrot.slane %v309, %v461
    %v465 = vlaneseq
    %v466 = vshrl.u32 %v465, 7
    %v467 = vsub.s32 %v416, %v466
    %v468 = vrot.slane %v322, %v467
    %v471 = vlaneseq
    %v472 = vshrl.u32 %v471, 7
    %v473 = vsub.s32 %v416, %v472
    %v474 = vrot.slane %v335, %v473
    %v477 = vlaneseq
    %v478 = vshrl.u32 %v477, 7
    %v479 = vsub.s32 %v416, %v478
    %v480 = vrot.slane %v348, %v479
    %v483 = vlaneseq
    %v484 = vshrl.u32 %v483, 7
    %v485 = vsub.s32 %v416, %v484
    %v486 = vrot.slane %v361, %v485
    %v489 = vlaneseq
    %v490 = vshrl.u32 %v489, 7
    %v491 = vsub.s32 %v416, %v490
    %v492 = vrot.slane %v374, %v491
    %v495 = vlaneseq
    %v496 = vshrl.u32 %v495, 7
    %v497 = vsub.s32 %v416, %v496
    %v498 = vrot.slane %v387, %v497
    %v501 = vlaneseq
    %v502 = vshrl.u32 %v501, 7
    %v503 = vsub.s32 %v416, %v502
    %v504 = vrot.slane %v400, %v503
    %v507 = vlaneseq
    %v508 = vshrl.u32 %v507, 7
    %v509 = vsub.s32 %v416, %v508
    %v510 = vrot.slane %v413, %v509
    %vm512 = vcmask 1040384
    %v513 = vsel %vm512, %v420, %v426
    %vm514 = vcmask 1041408
    %v515 = vsel %vm514, %v513, %v432
    %vm516 = vcmask 1042432
    %v517 = vsel %vm516, %v515, %v438
    %vm518 = vcmask 1043456
    %v519 = vsel %vm518, %v517, %v444
    %vm520 = vcmask 1044480
    %v521 = vsel %vm520, %v519, %v450
    %vm522 = vcmask 1045504
    %v523 = vsel %vm522, %v521, %v456
    %vm524 = vcmask 1046528
    %v525 = vsel %vm524, %v523, %v462
    %v526 = vsel %vm512, %v468, %v474
    %v527 = vsel %vm514, %v526, %v480
    %v528 = vsel %vm516, %v527, %v486
    %v529 = vsel %vm518, %v528, %v492
    %v530 = vsel %vm520, %v529, %v498
    %v531 = vsel %vm522, %v530, %v504
    %v532 = vsel %vm524, %v531, %v510
    %v533 = vmax.f32 %v525, 0.0
    %v534 = vmax.f32 %v532, 0.0
    %v536 = vlaneseq
    %v537 = vshrl.u32 %v536, 7
    %v538 = vsub.s32 0, %v537
    %v539 = vrot.slane %v191, %v538
    %v541 = vadd.f32 %v178, %v539
    %v542 = vadd.f32 %v183, %v539
    %v543 = vmax.f32 %v541, 0.0
    %v544 = vmax.f32 %v542, 0.0
    %vm545 = vcmask 130048
    %v546 = vsel %vm545, %v204, 0.0
    %v547 = vsel %vm545, %v205, 0.0
    %v548 = vadd.f32 %v546, %v547
    %v549 = vrot.slane %v548, 4
    %v550 = vadd.f32 %v548, %v549
    %v551 = vrot.slane %v550, 2
    %v552 = vadd.f32 %v550, %v551
    %v553 = vrot.slane %v552, 1
    %v554 = vadd.f32 %v552, %v553
    %vm555 = vcmask 122880
    %556 = vst.msk [vmem:[#allocation11] sm:$0x1] %vm555, %v554
    %vm557 = vcmask 64512
    %v558 = vsel %vm557, %v533, 0.0
    %v559 = vsel %vm557, %v534, 0.0
    %v560 = vadd.f32 %v558, %v559
    %v561 = vrot.slane %v560, 4
    %v562 = vadd.f32 %v560, %v561
    %v563 = vrot.slane %v562, 2
    %v564 = vadd.f32 %v562, %v563
    %v565 = vrot.slane %v564, 1
    %v566 = vadd.f32 %v564, %v565
    %vm567 = vcmask 57344
    %568 = vst.msk [vmem:[#allocation12] sm:$0x1] %vm567, %v566
    %v569 = vsel %vm545, %v543, 0.0
    %v570 = vsel %vm545, %v544, 0.0
    %v571 = vadd.f32 %v569, %v570
    %v572 = vrot.slane %v571, 4
    %v573 = vadd.f32 %v571, %v572
    %v574 = vrot.slane %v573, 2
    %v575 = vadd.f32 %v573, %v574
    %v576 = vrot.slane %v575, 1
    %v577 = vadd.f32 %v575, %v576
    %578 = vst.msk [vmem:[#allocation14] sm:$0x1] %vm555, %v577
    // Predicated region
    $region42: #{wh_contrastive_loss.1} parent=1 // pred_check
      _
    $region43: #{wh_contrastive_loss.1} parent=1 // pred_check_branch
      %580 = sbr.rel (0) target = $region45
    $region44: #{wh_contrastive_loss.1} parent=1 // pred_region
      %s582 = ssub.s32 16, 16
      %583 = vsyncadd [#allocation4], %s582
      %s585 = sshll.u32 [#allocation11], 4
      %s586 = int_to_ptr.vmem [resolvable:$true] %s585
      %588 = dma.vmem_to_hbm [thread:$0]  %s586, 16, %s5, [#allocation4]
    $region45: #{wh_contrastive_loss.1} parent=1 // pred_fallthru
      _
    // Predicated region
    $region46: #{wh_contrastive_loss.1} parent=1 // pred_check
      _
    $region47: #{wh_contrastive_loss.1} parent=1 // pred_check_branch
      %590 = sbr.rel (0) target = $region49
    $region48: #{wh_contrastive_loss.1} parent=1 // pred_region
      %s592 = ssub.s32 16, 16
      %593 = vsyncadd [#allocation13], %s592
      %s595 = sshll.u32 [#allocation12], 4
      %s596 = int_to_ptr.vmem [resolvable:$true] %s595
      %598 = dma.vmem_to_hbm [thread:$0]  %s596, 16, %s6, [#allocation13]
    $region49: #{wh_contrastive_loss.1} parent=1 // pred_fallthru
      _
    // Predicated region
    $region50: #{wh_contrastive_loss.1} parent=1 // pred_check
      _
    $region51: #{wh_contrastive_loss.1} parent=1 // pred_check_branch
      %600 = sbr.rel (0) target = $region53
    $region52: #{wh_contrastive_loss.1} parent=1 // pred_region
      %s602 = ssub.s32 16, 16
      %603 = vsyncadd [#allocation13], %s602
      %s605 = sshll.u32 [#allocation14], 4
      %s606 = int_to_ptr.vmem [resolvable:$true] %s605
      %608 = dma.vmem_to_hbm [thread:$0]  %s606, 16, %s7, [#allocation13]
    $region53: #{wh_contrastive_loss.1} parent=1 // pred_fallthru
      _
    // Predicated region
    $region54: #{wh_contrastive_loss.1} parent=1 // pred_check
      _
    $region55: #{wh_contrastive_loss.1} parent=1 // pred_check_branch
      %610 = sbr.rel (0) target = $region57
    $region56: #{wh_contrastive_loss.1} parent=1 // pred_region
      %611 = dma.done [#allocation4], 16
    $region57: #{wh_contrastive_loss.1} parent=1 // pred_fallthru
      _
    // Predicated region
    $region58: #{wh_contrastive_loss.1} parent=1 // pred_check
      _
    $region59: #{wh_contrastive_loss.1} parent=1 // pred_check_branch
      %613 = sbr.rel (0) target = $region61
    $region60: #{wh_contrastive_loss.1} parent=1 // pred_region
      %614 = dma.done [#allocation13], 16
    $region61: #{wh_contrastive_loss.1} parent=1 // pred_fallthru
      _
    // Predicated region
    $region62: #{wh_contrastive_loss.1} parent=1 // pred_check
      _
    $region63: #{wh_contrastive_loss.1} parent=1 // pred_check_branch
      %616 = sbr.rel (0) target = $region65
    $region64: #{wh_contrastive_loss.1} parent=1 // pred_region
      %617 = dma.done [#allocation13], 16
    $region65: #{wh_contrastive_loss.1} parent=1 // pred_fallthru
      _
    %618 = vsyncpa [#allocation3], 1
    %619 = vsyncpa [#allocation6], 1
    %620 = vsyncpa [#allocation9], 1
    %621 = vsyncpa [#allocation4], 1
    %622 = vsyncpa [#allocation13], 1

</llo_original>
